<compile_context>
chip_gen: v5e
topology: v5e:2x2
jax: 0.10.0
libtpu: 0.0.40
codegen_flags: <defaults>
</compile_context>

<pallas_src>
import functools

import jax
import jax.numpy as jnp
from jax.experimental import pallas as pl
from jax.experimental.pallas import tpu as pltpu

EPS = 0.7
LANE = 128


def _rmsnorm_all_kernel(x_ref, w_ref, o_ref, *, inv_n):
    # x_ref / w_ref / o_ref: (1, n_pad) float32 slabs resident in VMEM.
    # Padded lanes of x and w are zero, so they add nothing to the reduction.
    x = x_ref[...]
    ss = jnp.sum(x * x, axis=-1, keepdims=True)   # (1, 1) cross-lane reduce (XLU)
    scale = jax.lax.rsqrt(ss * inv_n + EPS)       # EUP rsqrt, inv_n = 1/true_n
    o_ref[...] = x * scale * w_ref[...]           # elementwise affine (VPU)


@jax.jit
def rms_norm_all(x: jax.Array, weight: jax.Array) -> jax.Array:
    """aten.rms_norm(x, list(x.shape), weight, eps=0.7): normalize over ALL dims."""
    assert x.shape == weight.shape
    orig_shape = x.shape
    n = 1
    for d in orig_shape:
        n *= d
    # Lane-dense presentation, padded to a multiple of 128 lanes for unmasked
    # vector loads/stores.
    n_pad = ((n + LANE - 1) // LANE) * LANE
    pad = n_pad - n
    x2d = jnp.pad(x.reshape(1, n), ((0, 0), (0, pad)))
    w2d = jnp.pad(weight.reshape(1, n), ((0, 0), (0, pad)))

    kernel = functools.partial(_rmsnorm_all_kernel, inv_n=1.0 / n)

    out = pl.pallas_call(
        kernel,
        out_shape=jax.ShapeDtypeStruct((1, n_pad), x.dtype),
        # Whole-array VMEM residency; no grid, no pipeline machinery.
        in_specs=[
            pl.BlockSpec(memory_space=pltpu.MemorySpace.VMEM),
            pl.BlockSpec(memory_space=pltpu.MemorySpace.VMEM),
        ],
        out_specs=pl.BlockSpec(memory_space=pltpu.MemorySpace.VMEM),
        # Donate the (temporary, internally padded) x slab as the output buffer.
        input_output_aliases={0: 0},
    )(x2d, w2d)
    # Slice padded lanes away before reshaping back.
    return out[0, :n].reshape(orig_shape)


if __name__ == "__main__":
    key = jax.random.PRNGKey(0)
    kx, kw = jax.random.split(key)
    x = jax.random.normal(kx, (5, 6, 3), dtype=jnp.float32)
    weight = jax.random.normal(kw, (5, 6, 3), dtype=jnp.float32)

    y = rms_norm_all(x, weight)
    y = jax.block_until_ready(y)

    # Reference in plain JAX: mean of squares over ALL dims (normalized_shape
    # == full shape), eps inside the sqrt, then elementwise weight.
    ref = x * jax.lax.rsqrt(jnp.mean(x * x) + EPS) * weight
    assert y.shape == (5, 6, 3)
    assert y.dtype == jnp.float32
    assert jnp.allclose(y, ref, atol=1e-5, rtol=1e-5)

    print("KERNEL_OK")
</pallas_src>

<mosaic_0001>
module attributes {stable_mosaic.version = 11 : i64} {
  func.func @_rmsnorm_all_kernel(%arg0: memref<1x128xf32, #tpu.memory_space<vmem>>, %arg1: memref<1x128xf32, #tpu.memory_space<vmem>>, %arg2: memref<1x128xf32, #tpu.memory_space<vmem>>) attributes {dimension_semantics = [], scalar_prefetch = 0 : i64, scratch_operands = 0 : i64, tpu.core_type = #tpu.core_type<tc>} {
    %c0 = arith.constant 0 : index
    %c0_0 = arith.constant 0 : index
    %0 = vector.load %arg0[%c0, %c0_0] : memref<1x128xf32, #tpu.memory_space<vmem>>, vector<1x128xf32>
    %1 = arith.mulf %0, %0 : vector<1x128xf32>
    %cst = arith.constant dense<0.000000e+00> : vector<1xf32>
    %2 = vector.multi_reduction <add>, %1, %cst [1] : vector<1x128xf32> to vector<1xf32>
    %3 = vector.shape_cast %2 : vector<1xf32> to vector<1x1xf32>
    %cst_1 = arith.constant 0.0111111114 : f32
    %4 = vector.broadcast %cst_1 : f32 to vector<1x1xf32>
    %5 = arith.mulf %3, %4 : vector<1x1xf32>
    %cst_2 = arith.constant 0.699999988 : f32
    %6 = vector.broadcast %cst_2 : f32 to vector<1x1xf32>
    %7 = arith.addf %5, %6 : vector<1x1xf32>
    %8 = math.rsqrt %7 : vector<1x1xf32>
    %9 = vector.broadcast %8 : vector<1x1xf32> to vector<1x128xf32>
    %10 = arith.mulf %0, %9 : vector<1x128xf32>
    %c0_3 = arith.constant 0 : index
    %c0_4 = arith.constant 0 : index
    %11 = vector.load %arg1[%c0_3, %c0_4] : memref<1x128xf32, #tpu.memory_space<vmem>>, vector<1x128xf32>
    %12 = arith.mulf %10, %11 : vector<1x128xf32>
    %c0_5 = arith.constant 0 : index
    %c0_6 = arith.constant 0 : index
    %13 = vector.load %arg2[%c0_5, %c0_6] : memref<1x128xf32, #tpu.memory_space<vmem>>, vector<1x128xf32>
    tpu.vector_store %arg2[%c0_5, %c0_6], %12 {strides = array<i32>} : memref<1x128xf32, #tpu.memory_space<vmem>>, vector<1x128xf32>,
    return
  }
}

</mosaic_0001>

<llo_original>
// kernel: squeeze.1
$region0: #{squeeze.1}
  %s0 = inlined_call_operand.vmem [shape: f32[90], index: 0, kind: input, shape index: {}]
  %s1 = inlined_call_operand.vmem [shape: f32[5,6,3], index: 1, kind: output, shape index: {}]
  $region1: #{squeeze.1} parent=0
    #allocation0 [shape = 'u8[4096]{0}', space=vmem, size = 0x1000, scoped, tag = 'scoped mem for input reshape']
    %s3 = ssub.s32 2, 1
    %v4 = vld [vmem:[%s0] sm:%s3]
    %5 = vst [vmem:[#allocation0] sm:%s3] %v4
    %v6 = vld [vmem:[#allocation0] sm:$0x1]
    %vm7 = vcmask 23552
    %8 = vst.msk [vmem:[%s1] sm:$0x1] %vm7, %v6
    %v9 = vld [vmem:[#allocation0] sm:$0x1]
    %10 = vrot.lane.b32.xlu0 %v9, 125
    %v11 = vpop.permute.xlu0 %10
    %vm12 = vcmask 23552
    %s13 = scalar_lea.vmem %s1, 1
    %14 = vst.msk [vmem:[%s13] sm:$0x1] %vm12, %v11
    %v15 = vld [vmem:[#allocation0] sm:$0x1]
    %16 = vrot.lane.b32.xlu0 %v15, 122
    %v17 = vpop.permute.xlu0 %16
    %vm18 = vcmask 23552
    %s19 = scalar_lea.vmem %s1, 2
    %20 = vst.msk [vmem:[%s19] sm:$0x1] %vm18, %v17
    %v21 = vld [vmem:[#allocation0] sm:$0x1]
    %22 = vrot.lane.b32.xlu0 %v21, 119
    %v23 = vpop.permute.xlu0 %22
    %vm24 = vcmask 23552
    %s25 = scalar_lea.vmem %s1, 3
    %26 = vst.msk [vmem:[%s25] sm:$0x1] %vm24, %v23
    %v27 = vld [vmem:[#allocation0] sm:$0x1]
    %28 = vrot.lane.b32.xlu0 %v27, 116
    %v29 = vpop.permute.xlu0 %28
    %vm30 = vcmask 23552
    %s31 = scalar_lea.vmem %s1, 4
    %32 = vst.msk [vmem:[%s31] sm:$0x1] %vm30, %v29
    %v33 = vld [vmem:[#allocation0] sm:$0x1]
    %34 = vrot.lane.b32.xlu0 %v33, 113
    %v35 = vpop.permute.xlu0 %34
    %vm36 = vcmask 23552
    %s37 = scalar_lea.vmem %s1, 5
    %38 = vst.msk [vmem:[%s37] sm:$0x1] %vm36, %v35
    %v39 = vld [vmem:[#allocation0] sm:$0x1]
    %40 = vrot.lane.b32.xlu0 %v39, 110
    %v41 = vpop.permute.xlu0 %40
    %vm42 = vcmask 23552
    %s43 = scalar_lea.vmem %s1, 8
    %44 = vst.msk [vmem:[%s43] sm:$0x1] %vm42, %v41
    %v45 = vld [vmem:[#allocation0] sm:$0x1]
    %46 = vrot.lane.b32.xlu0 %v45, 107
    %v47 = vpop.permute.xlu0 %46
    %vm48 = vcmask 23552
    %s49 = scalar_lea.vmem %s1, 9
    %50 = vst.msk [vmem:[%s49] sm:$0x1] %vm48, %v47
    %v51 = vld [vmem:[#allocation0] sm:$0x1]
    %52 = vrot.lane.b32.xlu0 %v51, 104
    %v53 = vpop.permute.xlu0 %52
    %vm54 = vcmask 23552
    %s55 = scalar_lea.vmem %s1, 10
    %56 = vst.msk [vmem:[%s55] sm:$0x1] %vm54, %v53
    %v57 = vld [vmem:[#allocation0] sm:$0x1]
    %58 = vrot.lane.b32.xlu0 %v57, 101
    %v59 = vpop.permute.xlu0 %58
    %vm60 = vcmask 23552
    %s61 = scalar_lea.vmem %s1, 11
    %62 = vst.msk [vmem:[%s61] sm:$0x1] %vm60, %v59
    %v63 = vld [vmem:[#allocation0] sm:$0x1]
    %64 = vrot.lane.b32.xlu0 %v63, 98
    %v65 = vpop.permute.xlu0 %64
    %vm66 = vcmask 23552
    %s67 = scalar_lea.vmem %s1, 12
    %68 = vst.msk [vmem:[%s67] sm:$0x1] %vm66, %v65
    %v69 = vld [vmem:[#allocation0] sm:$0x1]
    %70 = vrot.lane.b32.xlu0 %v69, 95
    %v71 = vpop.permute.xlu0 %70
    %vm72 = vcmask 23552
    %s73 = scalar_lea.vmem %s1, 13
    %74 = vst.msk [vmem:[%s73] sm:$0x1] %vm72, %v71
    %v75 = vld [vmem:[#allocation0] sm:$0x1]
    %76 = vrot.lane.b32.xlu0 %v75, 92
    %v77 = vpop.permute.xlu0 %76
    %vm78 = vcmask 23552
    %s79 = scalar_lea.vmem %s1, 16
    %80 = vst.msk [vmem:[%s79] sm:$0x1] %vm78, %v77
    %v81 = vld [vmem:[#allocation0] sm:$0x1]
    %82 = vrot.lane.b32.xlu0 %v81, 89
    %v83 = vpop.permute.xlu0 %82
    %vm84 = vcmask 23552
    %s85 = scalar_lea.vmem %s1, 17
    %86 = vst.msk [vmem:[%s85] sm:$0x1] %vm84, %v83
    %v87 = vld [vmem:[#allocation0] sm:$0x1]
    %88 = vrot.lane.b32.xlu0 %v87, 86
    %v89 = vpop.permute.xlu0 %88
    %vm90 = vcmask 23552
    %s91 = scalar_lea.vmem %s1, 18
    %92 = vst.msk [vmem:[%s91] sm:$0x1] %vm90, %v89
    %v93 = vld [vmem:[#allocation0] sm:$0x1]
    %94 = vrot.lane.b32.xlu0 %v93, 83
    %v95 = vpop.permute.xlu0 %94
    %vm96 = vcmask 23552
    %s97 = scalar_lea.vmem %s1, 19
    %98 = vst.msk [vmem:[%s97] sm:$0x1] %vm96, %v95
    %v99 = vld [vmem:[#allocation0] sm:$0x1]
    %100 = vrot.lane.b32.xlu0 %v99, 80
    %v101 = vpop.permute.xlu0 %100
    %vm102 = vcmask 23552
    %s103 = scalar_lea.vmem %s1, 20
    %104 = vst.msk [vmem:[%s103] sm:$0x1] %vm102, %v101
    %v105 = vld [vmem:[#allocation0] sm:$0x1]
    %106 = vrot.lane.b32.xlu0 %v105, 77
    %v107 = vpop.permute.xlu0 %106
    %vm108 = vcmask 23552
    %s109 = scalar_lea.vmem %s1, 21
    %110 = vst.msk [vmem:[%s109] sm:$0x1] %vm108, %v107
    %v111 = vld [vmem:[#allocation0] sm:$0x1]
    %112 = vrot.lane.b32.xlu0 %v111, 74
    %v113 = vpop.permute.xlu0 %112
    %vm114 = vcmask 23552
    %s115 = scalar_lea.vmem %s1, 24
    %116 = vst.msk [vmem:[%s115] sm:$0x1] %vm114, %v113
    %v117 = vld [vmem:[#allocation0] sm:$0x1]
    %118 = vrot.lane.b32.xlu0 %v117, 71
    %v119 = vpop.permute.xlu0 %118
    %vm120 = vcmask 23552
    %s121 = scalar_lea.vmem %s1, 25
    %122 = vst.msk [vmem:[%s121] sm:$0x1] %vm120, %v119
    %v123 = vld [vmem:[#allocation0] sm:$0x1]
    %124 = vrot.lane.b32.xlu0 %v123, 68
    %v125 = vpop.permute.xlu0 %124
    %vm126 = vcmask 23552
    %s127 = scalar_lea.vmem %s1, 26
    %128 = vst.msk [vmem:[%s127] sm:$0x1] %vm126, %v125
    %v129 = vld [vmem:[#allocation0] sm:$0x1]
    %130 = vrot.lane.b32.xlu0 %v129, 65
    %v131 = vpop.permute.xlu0 %130
    %vm132 = vcmask 23552
    %s133 = scalar_lea.vmem %s1, 27
    %134 = vst.msk [vmem:[%s133] sm:$0x1] %vm132, %v131
    %v135 = vld [vmem:[#allocation0] sm:$0x1]
    %136 = vrot.lane.b32.xlu0 %v135, 62
    %v137 = vpop.permute.xlu0 %136
    %vm138 = vcmask 23552
    %s139 = scalar_lea.vmem %s1, 28
    %140 = vst.msk [vmem:[%s139] sm:$0x1] %vm138, %v137
    %v141 = vld [vmem:[#allocation0] sm:$0x1]
    %142 = vrot.lane.b32.xlu0 %v141, 59
    %v143 = vpop.permute.xlu0 %142
    %vm144 = vcmask 23552
    %s145 = scalar_lea.vmem %s1, 29
    %146 = vst.msk [vmem:[%s145] sm:$0x1] %vm144, %v143
    %v147 = vld [vmem:[#allocation0] sm:$0x1]
    %148 = vrot.lane.b32.xlu0 %v147, 56
    %v149 = vpop.permute.xlu0 %148
    %vm150 = vcmask 23552
    %s151 = scalar_lea.vmem %s1, 32
    %152 = vst.msk [vmem:[%s151] sm:$0x1] %vm150, %v149
    %v153 = vld [vmem:[#allocation0] sm:$0x1]
    %154 = vrot.lane.b32.xlu0 %v153, 53
    %v155 = vpop.permute.xlu0 %154
    %vm156 = vcmask 23552
    %s157 = scalar_lea.vmem %s1, 33
    %158 = vst.msk [vmem:[%s157] sm:$0x1] %vm156, %v155
    %v159 = vld [vmem:[#allocation0] sm:$0x1]
    %160 = vrot.lane.b32.xlu0 %v159, 50
    %v161 = vpop.permute.xlu0 %160
    %vm162 = vcmask 23552
    %s163 = scalar_lea.vmem %s1, 34
    %164 = vst.msk [vmem:[%s163] sm:$0x1] %vm162, %v161
    %v165 = vld [vmem:[#allocation0] sm:$0x1]
    %166 = vrot.lane.b32.xlu0 %v165, 47
    %v167 = vpop.permute.xlu0 %166
    %vm168 = vcmask 23552
    %s169 = scalar_lea.vmem %s1, 35
    %170 = vst.msk [vmem:[%s169] sm:$0x1] %vm168, %v167
    %v171 = vld [vmem:[#allocation0] sm:$0x1]
    %172 = vrot.lane.b32.xlu0 %v171, 44
    %v173 = vpop.permute.xlu0 %172
    %vm174 = vcmask 23552
    %s175 = scalar_lea.vmem %s1, 36
    %176 = vst.msk [vmem:[%s175] sm:$0x1] %vm174, %v173
    %v177 = vld [vmem:[#allocation0] sm:$0x1]
    %178 = vrot.lane.b32.xlu0 %v177, 41
    %v179 = vpop.permute.xlu0 %178
    %vm180 = vcmask 23552
    %s181 = scalar_lea.vmem %s1, 37
    %182 = vst.msk [vmem:[%s181] sm:$0x1] %vm180, %v179

// kernel: rms_norm_all.1
$region0: #{rms_norm_all.1}
  #allocation0 [shape = 'u32[]', space=smem, size = 0x4, offset = 0x4, fixed_abs, tag = 'smem constant byte address 0x4 - core index']
  #allocation1 [shape = 'u32[72,128]{1,0:T(1,128)}', space=vmem, size = 0x9000, scoped, tag = 'internal scratch']
  %s0 = inlined_call_operand.vmem [shape: f32[1,128], index: 0, kind: input, shape index: {}, may-alias: {0,2}]
  %s1 = inlined_call_operand.vmem [shape: f32[1,128], index: 1, kind: input, shape index: {}]
  %s2 = inlined_call_operand.vmem [shape: f32[1,128], index: 2, kind: output, shape index: {}, may-alias: {0,2}]
  %s3 = sld [smem:[#allocation0]]
  $region18: #{rms_norm_all.1} parent=0
    _
  %s5 = ssub.s32 1, %s3
  %s6 = scalar_select 0, %s5, %s3
  // Predicated region
  $region2: #{rms_norm_all.1} parent=0 // pred_check
    _
  $region3: #{rms_norm_all.1} parent=0 // pred_check_branch
    %8 = sbr.rel (0) target = $region5
  $region4: #{rms_norm_all.1} parent=0 // pred_region
    _
  $region5: #{rms_norm_all.1} parent=0 // pred_fallthru
    _
  // Predicated region
  $region6: #{rms_norm_all.1} parent=0 // pred_check
    _
  $region7: #{rms_norm_all.1} parent=0 // pred_check_branch
    %10 = sbr.rel (0) target = $region9
  $region8: #{rms_norm_all.1} parent=0 // pred_region
    _
  $region9: #{rms_norm_all.1} parent=0 // pred_fallthru
    _
  %v11 = vld [vmem:[%s0] sm:$0x1]
  %v12 = vmul.f32 %v11, %v11
  %vm13 = vcmask 1040384
  %v14 = vsel %vm13, %v12, 0.0
  %15 = vadd.xlane.f32.xlu0 %v14
  %v16 = vpop.xlane.xlu0 %15
  %v17 = vmul.f32 %v16, 0.011111111
  %v18 = vadd.f32 %v17, 0.7
  %v19 = vrsqrt.pop %v18
  %v20 = vmul.f32 %v19, %v18
  %v21 = vmul.f32 %v20, %v19
  %v22 = vmul.f32 0.5, %v21
  %v23 = vsub.f32 1.5, %v22
  %v24 = vmul.f32 %v19, %v23
  %vm25 = vweird.f32 %v18
  %vm26 = vweird.f32 %v19
  %vm27 = vmor %vm25, %vm26
  %v28 = vsel %vm27, %v19, %v24
  %v29 = vmul.f32 %v11, %v28
  %v30 = vld [vmem:[%s1] sm:$0x1]
  %v31 = vmul.f32 %v29, %v30
  %32 = vst [vmem:[%s2] sm:$0x1] %v31
  // Predicated region
  $region10: #{rms_norm_all.1} parent=0 // pred_check
    _
  $region11: #{rms_norm_all.1} parent=0 // pred_check_branch
    %34 = sbr.rel (0) target = $region13
  $region12: #{rms_norm_all.1} parent=0 // pred_region
    _
  $region13: #{rms_norm_all.1} parent=0 // pred_fallthru
    _
  // Predicated region
  $region14: #{rms_norm_all.1} parent=0 // pred_check
    _
  $region15: #{rms_norm_all.1} parent=0 // pred_check_branch
    %36 = sbr.rel (0) target = $region17
  $region16: #{rms_norm_all.1} parent=0 // pred_region
    _
  $region17: #{rms_norm_all.1} parent=0 // pred_fallthru
    _

</llo_original>
